<compile_context>
chip_gen: v7x
topology: tpu7x:2x2x1
jax: 0.10.0
libtpu: 0.0.40
codegen_flags: <defaults>
</compile_context>

<pallas_src>
import math
from functools import partial

import jax
import jax.numpy as jnp
from jax.experimental import pallas as pl
from jax.experimental.pallas import tpu as pltpu


# ----------------------------------------------------------------------------
# Kernel A: fused (scaled-Q | K | V) projection + head split.
# ----------------------------------------------------------------------------
def qkv_head_split_kernel(x_ref, wqkv_ref, bqkv_ref, q_ref, k_ref, v_ref, *,
                          num_heads):
    """x_ref: [1,TS,E]; wqkv_ref: [E,3E]; bqkv_ref: [1,3E];
    q/k/v_ref: [1,H,TS,hd] (q pre-scaled by 1/sqrt(hd))."""
    cdt = wqkv_ref.dtype
    x = x_ref[0]                                     # [TS, E] (compute dtype)
    ts, e = x.shape
    hd = e // num_heads

    qkv = jnp.dot(x, wqkv_ref[...], preferred_element_type=jnp.float32)
    qkv = (qkv + bqkv_ref[...]).astype(cdt)          # cast BEFORE the relayouts

    def head_split(m):                               # [TS,E] -> [H,TS,hd]
        return jnp.transpose(m.reshape(ts, num_heads, hd), (1, 0, 2))

    q_ref[0] = head_split(qkv[:, :e])
    k_ref[0] = head_split(qkv[:, e:2 * e])
    v_ref[0] = head_split(qkv[:, 2 * e:])


# ----------------------------------------------------------------------------
# Kernel B: flash (online-softmax) attention + fused head-merge/out projection.
# ----------------------------------------------------------------------------
def flash_mhsa_kernel(q_ref, k_ref, v_ref, wo_ref, bo_ref, o_ref,
                      m_scr, l_scr, acc_scr):
    """q_ref: [1,H,TQ,hd] (pre-scaled); k/v_ref: [1,H,TK,hd];
    wo_ref: [E,E]; bo_ref: [1,E]; o_ref: [1,TQ,E];
    scratch: m/l [H,TQ,1] f32, acc [H,TQ,hd] f32."""
    ki = pl.program_id(2)

    @pl.when(ki == 0)
    def _():
        m_scr[...] = jnp.full_like(m_scr, -jnp.inf)
        l_scr[...] = jnp.zeros_like(l_scr)
        acc_scr[...] = jnp.zeros_like(acc_scr)

    q = q_ref[0]                                     # [H, TQ, hd] compute dtype
    k = k_ref[0]                                     # [H, TK, hd]
    v = v_ref[0]                                     # [H, TK, hd]

    # Batched-head QK^T; contraction on the last dim -> no explicit K transpose.
    s = jnp.einsum('hqd,hkd->hqk', q, k,
                   preferred_element_type=jnp.float32)          # [H, TQ, TK] f32

    m_prev = m_scr[...]
    m_new = jnp.maximum(m_prev, jnp.max(s, axis=-1, keepdims=True))
    alpha = jnp.exp(m_prev - m_new)
    p = jnp.exp(s - m_new)                            # EUP exp, hidden under PV
    l_scr[...] = alpha * l_scr[...] + jnp.sum(p, axis=-1, keepdims=True)
    acc_scr[...] = alpha * acc_scr[...] + jnp.einsum(
        'hqk,hkd->hqd', p.astype(v.dtype), v,         # single cast of p
        preferred_element_type=jnp.float32)
    m_scr[...] = m_new

    @pl.when(ki == pl.num_programs(2) - 1)
    def _():
        h, tq, hd = acc_scr.shape
        inv_l = pl.reciprocal(l_scr[...], approx=False)          # exact divide
        attn = (acc_scr[...] * inv_l).astype(wo_ref.dtype)       # cast, then relayout
        attn = jnp.transpose(attn, (1, 0, 2)).reshape(tq, h * hd)  # head merge
        out = jnp.dot(attn, wo_ref[...], preferred_element_type=jnp.float32)
        o_ref[0] = (out + bo_ref[...]).astype(o_ref.dtype)       # dropout p=0 -> id


# ----------------------------------------------------------------------------
# Host-side helpers / wrapper.
# ----------------------------------------------------------------------------
def _pick_tile(s, pref=256):
    """Largest multiple of 8 that divides s, capped at `pref`; else the full s."""
    start = min(pref, s)
    start -= start % 8
    for t in range(start, 0, -8):
        if s % t == 0:
            return t
    return s


def _const_spec(shape, index_map):
    """Constant-index (weight/bias) block: single-buffer to halve VMEM residency."""
    if hasattr(pl, "Buffered"):
        try:
            return pl.BlockSpec(shape, index_map, pipeline_mode=pl.Buffered(1))
        except Exception:
            pass
    return pl.BlockSpec(shape, index_map)


def _vmem_limit_bytes():
    """Generation-aware scoped-VMEM budget: ~75% of physical, capped at 100 MiB.
    v7x (64 MiB) -> 48 MiB; v5e/v6e (128 MiB) -> 96 MiB."""
    cap = 128 * 1024 * 1024
    try:
        info = pltpu.get_tpu_info()
        cap = int(getattr(info, "vmem_capacity_bytes", cap))
    except Exception:
        pass
    return min((cap * 3) // 4, 100 * 1024 * 1024)


def multi_head_self_attention(x, params, num_heads,
                              compute_dtype=jnp.bfloat16,
                              q_tile=256, kv_tile=256, proj_tile=256):
    """x: [B, S, E]; params: PyTorch-layout weights (W: [E_out, E_in], b: [E]).

    compute_dtype: MXU input dtype (bf16 default on all generations — the v5e
    MXU is bf16-native too); accumulation and softmax stay f32.
    """
    B, S, E = x.shape
    assert E % num_heads == 0, "embed_dim must be divisible by num_heads"
    hd = E // num_heads
    scale = 1.0 / math.sqrt(hd)
    cdt = compute_dtype

    ts = _pick_tile(S, proj_tile)
    tq = _pick_tile(S, q_tile)
    tk = _pick_tile(S, kv_tile)

    # Host-side weight prep: y = x @ W^T + b; fold 1/sqrt(hd) into Q weights/bias;
    # fuse Q|K|V into one [E,3E] matmul; keep Wo as a single [E,E] (head merge is
    # fused into one K=E output matmul inside the kernel).
    wqkv = jnp.concatenate(
        [params["wq"].T * scale, params["wk"].T, params["wv"].T], axis=1
    ).astype(cdt)                                                   # [E, 3E]
    bqkv = jnp.concatenate(
        [params["bq"] * scale, params["bk"], params["bv"]], axis=0
    ).reshape(1, 3 * E).astype(jnp.float32)                         # [1, 3E]
    wo = params["wo"].T.astype(cdt)                                 # [E, E]
    bo = params["bo"].reshape(1, E).astype(jnp.float32)             # [1, E]
    x_c = x.astype(cdt)

    vmem_limit = _vmem_limit_bytes()
    itemsize = jnp.dtype(cdt).itemsize
    qkv_shape = jax.ShapeDtypeStruct((B, num_heads, S, hd), cdt)

    # ---------------- Kernel A: QKV projection + head split ----------------
    qkv_call = pl.pallas_call(
        partial(qkv_head_split_kernel, num_heads=num_heads),
        out_shape=(qkv_shape, qkv_shape, qkv_shape),
        grid_spec=pltpu.PrefetchScalarGridSpec(
            num_scalar_prefetch=0,
            grid=(B, S // ts),
            in_specs=[
                pl.BlockSpec((1, ts, E), lambda b, si: (b, si, 0)),     # x tile
                _const_spec((E, 3 * E), lambda b, si: (0, 0)),          # fused W
                _const_spec((1, 3 * E), lambda b, si: (0, 0)),          # fused b
            ],
            out_specs=[
                pl.BlockSpec((1, num_heads, ts, hd), lambda b, si: (b, 0, si, 0)),
                pl.BlockSpec((1, num_heads, ts, hd), lambda b, si: (b, 0, si, 0)),
                pl.BlockSpec((1, num_heads, ts, hd), lambda b, si: (b, 0, si, 0)),
            ],
        ),
        compiler_params=pltpu.CompilerParams(
            dimension_semantics=("parallel", "parallel"),
            vmem_limit_bytes=vmem_limit,
        ),
        cost_estimate=pl.CostEstimate(
            flops=int(2 * B * S * E * 3 * E),
            transcendentals=0,
            bytes_accessed=int(B * S * E * itemsize
                               + (3 * E * E + 3 * E) * itemsize
                               + 3 * B * S * E * itemsize),
        ),
    )
    q, k, v = qkv_call(x_c, wqkv, bqkv)

    # --------- Kernel B: flash attention + fused output projection ---------
    attn_call = pl.pallas_call(
        flash_mhsa_kernel,
        out_shape=jax.ShapeDtypeStruct((B, S, E), x.dtype),
        grid_spec=pltpu.PrefetchScalarGridSpec(
            num_scalar_prefetch=0,
            grid=(B, S // tq, S // tk),
            in_specs=[
                pl.BlockSpec((1, num_heads, tq, hd), lambda b, qi, ki: (b, 0, qi, 0)),
                pl.BlockSpec((1, num_heads, tk, hd), lambda b, qi, ki: (b, 0, ki, 0)),
                pl.BlockSpec((1, num_heads, tk, hd), lambda b, qi, ki: (b, 0, ki, 0)),
                _const_spec((E, E), lambda b, qi, ki: (0, 0)),          # Wo
                _const_spec((1, E), lambda b, qi, ki: (0, 0)),          # bo
            ],
            out_specs=pl.BlockSpec((1, tq, E), lambda b, qi, ki: (b, qi, 0)),
            scratch_shapes=[
                pltpu.VMEM((num_heads, tq, 1), jnp.float32),   # running max m
                pltpu.VMEM((num_heads, tq, 1), jnp.float32),   # running sum l
                pltpu.VMEM((num_heads, tq, hd), jnp.float32),  # output accumulator
            ],
        ),
        compiler_params=pltpu.CompilerParams(
            # (batch, q-tile) megacore-parallel; KV axis is the reduction.
            dimension_semantics=("parallel", "parallel", "arbitrary"),
            vmem_limit_bytes=vmem_limit,
        ),
        cost_estimate=pl.CostEstimate(
            flops=int(B * (4 * S * S * E + 2 * S * E * E)),
            transcendentals=int(B * num_heads * S * S),
            bytes_accessed=int(3 * B * S * E * itemsize * (S // tq if S > tq else 1)
                               + (E * E + E) * itemsize
                               + B * S * E * x.dtype.itemsize),
        ),
    )
    return attn_call(q, k, v, wo, bo)


# ----------------------------------------------------------------------------
# Pure-JAX reference (matches the PyTorch module forward).
# ----------------------------------------------------------------------------
def reference(x, params, num_heads):
    B, S, E = x.shape
    hd = E // num_heads
    q = x @ params["wq"].T + params["bq"]
    k = x @ params["wk"].T + params["bk"]
    v = x @ params["wv"].T + params["bv"]
    q = q.reshape(B, S, num_heads, hd).transpose(0, 2, 1, 3)
    k = k.reshape(B, S, num_heads, hd).transpose(0, 2, 1, 3)
    v = v.reshape(B, S, num_heads, hd).transpose(0, 2, 1, 3)
    s = jnp.einsum("bhqd,bhkd->bhqk", q, k) / math.sqrt(hd)
    p = jax.nn.softmax(s, axis=-1)
    o = jnp.einsum("bhqk,bhkd->bhqd", p, v)
    o = o.transpose(0, 2, 1, 3).reshape(B, S, E)
    return o @ params["wo"].T + params["bo"]


if __name__ == "__main__":
    # Small correctness shapes only (perf should be measured at S,E multiples
    # of the (16,128) bf16 tile; these toy dims fully fit one block each).
    B, S, E, H = 2, 8, 32, 4
    key = jax.random.PRNGKey(0)
    keys = jax.random.split(key, 9)
    bound = 1.0 / math.sqrt(E)  # nn.Linear-style uniform init
    params = {
        "wq": jax.random.uniform(keys[0], (E, E), jnp.float32, -bound, bound),
        "bq": jax.random.uniform(keys[1], (E,), jnp.float32, -bound, bound),
        "wk": jax.random.uniform(keys[2], (E, E), jnp.float32, -bound, bound),
        "bk": jax.random.uniform(keys[3], (E,), jnp.float32, -bound, bound),
        "wv": jax.random.uniform(keys[4], (E, E), jnp.float32, -bound, bound),
        "bv": jax.random.uniform(keys[5], (E,), jnp.float32, -bound, bound),
        "wo": jax.random.uniform(keys[6], (E, E), jnp.float32, -bound, bound),
        "bo": jax.random.uniform(keys[7], (E,), jnp.float32, -bound, bound),
    }
    x = jax.random.normal(keys[8], (B, S, E), jnp.float32)

    ref = reference(x, params, H)

    # f32 MXU-input path (tight tolerance).
    out_f32 = jax.block_until_ready(
        multi_head_self_attention(x, params, H, compute_dtype=jnp.float32))
    assert jnp.allclose(out_f32, ref, atol=1e-3, rtol=1e-3), "f32 kernel mismatch"

    # bf16 MXU-input path (default; f32 accumulation + f32 softmax).
    out_bf16 = jax.block_until_ready(
        multi_head_self_attention(x, params, H))
    assert jnp.allclose(out_bf16, ref, atol=5e-2, rtol=5e-2), "bf16 kernel mismatch"

    print("KERNEL_OK")
</pallas_src>

<mosaic_0001>
module attributes {stable_mosaic.version = 11 : i64} {
  func.func @qkv_head_split_kernel(%arg0: i32, %arg1: i32, %arg2: memref<1x8x32xf32, #tpu.memory_space<vmem>>, %arg3: memref<32x96xf32, #tpu.memory_space<vmem>>, %arg4: memref<1x96xf32, #tpu.memory_space<vmem>>, %arg5: memref<1x4x8x8xf32, #tpu.memory_space<vmem>>, %arg6: memref<1x4x8x8xf32, #tpu.memory_space<vmem>>, %arg7: memref<1x4x8x8xf32, #tpu.memory_space<vmem>>) attributes {dimension_semantics = [#tpu.dimension_semantics<parallel>, #tpu.dimension_semantics<parallel>], iteration_bounds = array<i64: 2, 1>, scalar_prefetch = 0 : i64, scratch_operands = 0 : i64, tpu.core_type = #tpu.core_type<tc>, window_params = [{transform_indices = @transform_0, window_bounds = array<i64: 1, 8, 32>}, {pipeline_mode = #tpu.pipeline_mode<synchronous>, transform_indices = @transform_1, window_bounds = array<i64: 32, 96>}, {pipeline_mode = #tpu.pipeline_mode<synchronous>, transform_indices = @transform_2, window_bounds = array<i64: 1, 96>}, {transform_indices = @transform_3, window_bounds = array<i64: 1, 4, 8, 8>}, {transform_indices = @transform_4, window_bounds = array<i64: 1, 4, 8, 8>}, {transform_indices = @transform_5, window_bounds = array<i64: 1, 4, 8, 8>}]} {
    %c0 = arith.constant 0 : index
    %c0_0 = arith.constant 0 : index
    %c0_1 = arith.constant 0 : index
    %0 = vector.load %arg2[%c0, %c0_0, %c0_1] : memref<1x8x32xf32, #tpu.memory_space<vmem>>, vector<1x8x32xf32>
    %1 = vector.shape_cast %0 : vector<1x8x32xf32> to vector<8x32xf32>
    %c0_2 = arith.constant 0 : index
    %c0_3 = arith.constant 0 : index
    %2 = vector.load %arg3[%c0_2, %c0_3] : memref<32x96xf32, #tpu.memory_space<vmem>>, vector<32x96xf32>
    %cst = arith.constant dense<0.000000e+00> : vector<8x96xf32>
    %3 = tpu.matmul %1, %2, %cst {dimension_numbers = #tpu.dot_dimension_numbers<[1], [0], [0], [1], [0, 0, 1, 1], [], []>} : vector<8x32xf32>, vector<32x96xf32>, vector<8x96xf32> -> vector<8x96xf32>
    %c0_4 = arith.constant 0 : index
    %c0_5 = arith.constant 0 : index
    %4 = vector.load %arg4[%c0_4, %c0_5] : memref<1x96xf32, #tpu.memory_space<vmem>>, vector<1x96xf32>
    %5 = vector.broadcast %4 : vector<1x96xf32> to vector<8x96xf32>
    %6 = arith.addf %3, %5 : vector<8x96xf32>
    %7 = vector.extract_strided_slice %6 {offsets = [0, 0], sizes = [8, 32], strides = [1, 1]} : vector<8x96xf32> to vector<8x32xf32>
    %8 = vector.shape_cast %7 : vector<8x32xf32> to vector<8x4x8xf32>
    %9 = tpu.transpose %8, [1, 0, 2] : vector<8x4x8xf32> -> vector<4x8x8xf32>
    %c0_6 = arith.constant 0 : index
    %c0_7 = arith.constant 0 : index
    %c0_8 = arith.constant 0 : index
    %c0_9 = arith.constant 0 : index
    %10 = vector.load %arg5[%c0_6, %c0_7, %c0_8, %c0_9] : memref<1x4x8x8xf32, #tpu.memory_space<vmem>>, vector<1x4x8x8xf32>
    %11 = vector.shape_cast %10 : vector<1x4x8x8xf32> to vector<4x8x8xf32>
    %12 = vector.shape_cast %9 : vector<4x8x8xf32> to vector<1x4x8x8xf32>
    tpu.vector_store %arg5[%c0_6, %c0_7, %c0_8, %c0_9], %12 {strides = array<i32>} : memref<1x4x8x8xf32, #tpu.memory_space<vmem>>, vector<1x4x8x8xf32>,
    %13 = vector.extract_strided_slice %6 {offsets = [0, 32], sizes = [8, 32], strides = [1, 1]} : vector<8x96xf32> to vector<8x32xf32>
    %14 = vector.shape_cast %13 : vector<8x32xf32> to vector<8x4x8xf32>
    %15 = tpu.transpose %14, [1, 0, 2] : vector<8x4x8xf32> -> vector<4x8x8xf32>
    %c0_10 = arith.constant 0 : index
    %c0_11 = arith.constant 0 : index
    %c0_12 = arith.constant 0 : index
    %c0_13 = arith.constant 0 : index
    %16 = vector.load %arg6[%c0_10, %c0_11, %c0_12, %c0_13] : memref<1x4x8x8xf32, #tpu.memory_space<vmem>>, vector<1x4x8x8xf32>
    %17 = vector.shape_cast %16 : vector<1x4x8x8xf32> to vector<4x8x8xf32>
    %18 = vector.shape_cast %15 : vector<4x8x8xf32> to vector<1x4x8x8xf32>
    tpu.vector_store %arg6[%c0_10, %c0_11, %c0_12, %c0_13], %18 {strides = array<i32>} : memref<1x4x8x8xf32, #tpu.memory_space<vmem>>, vector<1x4x8x8xf32>,
    %19 = vector.extract_strided_slice %6 {offsets = [0, 64], sizes = [8, 32], strides = [1, 1]} : vector<8x96xf32> to vector<8x32xf32>
    %20 = vector.shape_cast %19 : vector<8x32xf32> to vector<8x4x8xf32>
    %21 = tpu.transpose %20, [1, 0, 2] : vector<8x4x8xf32> -> vector<4x8x8xf32>
    %c0_14 = arith.constant 0 : index
    %c0_15 = arith.constant 0 : index
    %c0_16 = arith.constant 0 : index
    %c0_17 = arith.constant 0 : index
    %22 = vector.load %arg7[%c0_14, %c0_15, %c0_16, %c0_17] : memref<1x4x8x8xf32, #tpu.memory_space<vmem>>, vector<1x4x8x8xf32>
    %23 = vector.shape_cast %22 : vector<1x4x8x8xf32> to vector<4x8x8xf32>
    %24 = vector.shape_cast %21 : vector<4x8x8xf32> to vector<1x4x8x8xf32>
    tpu.vector_store %arg7[%c0_14, %c0_15, %c0_16, %c0_17], %24 {strides = array<i32>} : memref<1x4x8x8xf32, #tpu.memory_space<vmem>>, vector<1x4x8x8xf32>,
    return
  }
  func.func @transform_0(%arg0: i32, %arg1: i32) -> (i32, i32, i32) {
    %c0_i32 = arith.constant 0 : i32
    %c0_i32_0 = arith.constant 0 : i32
    return %arg0, %arg1, %c0_i32 : i32, i32, i32
  }
  func.func @transform_1(%arg0: i32, %arg1: i32) -> (i32, i32) {
    %c0_i32 = arith.constant 0 : i32
    %c0_i32_0 = arith.constant 0 : i32
    %c0_i32_1 = arith.constant 0 : i32
    return %c0_i32, %c0_i32_0 : i32, i32
  }
  func.func @transform_2(%arg0: i32, %arg1: i32) -> (i32, i32) {
    %c0_i32 = arith.constant 0 : i32
    %c0_i32_0 = arith.constant 0 : i32
    %c0_i32_1 = arith.constant 0 : i32
    return %c0_i32, %c0_i32_0 : i32, i32
  }
  func.func @transform_3(%arg0: i32, %arg1: i32) -> (i32, i32, i32, i32) {
    %c0_i32 = arith.constant 0 : i32
    %c0_i32_0 = arith.constant 0 : i32
    %c0_i32_1 = arith.constant 0 : i32
    return %arg0, %c0_i32, %arg1, %c0_i32_0 : i32, i32, i32, i32
  }
  func.func @transform_4(%arg0: i32, %arg1: i32) -> (i32, i32, i32, i32) {
    %c0_i32 = arith.constant 0 : i32
    %c0_i32_0 = arith.constant 0 : i32
    %c0_i32_1 = arith.constant 0 : i32
    return %arg0, %c0_i32, %arg1, %c0_i32_0 : i32, i32, i32, i32
  }
  func.func @transform_5(%arg0: i32, %arg1: i32) -> (i32, i32, i32, i32) {
    %c0_i32 = arith.constant 0 : i32
    %c0_i32_0 = arith.constant 0 : i32
    %c0_i32_1 = arith.constant 0 : i32
    return %arg0, %c0_i32, %arg1, %c0_i32_0 : i32, i32, i32, i32
  }
}

</mosaic_0001>

<llo_original>
// kernel: tpu_custom_call.1
$region0: #{tpu_custom_call.1}
  #allocation0 [shape = 'u32[]', space=smem, size = 0x4, offset = 0x4, fixed_abs, tag = 'smem constant byte address 0x4 - core index']
  #allocation1 [shape = 'u32[144,128]{1,0:T(1,128)}', space=vmem, size = 0x12000, scoped, tag = 'internal scratch']
  %s0 = inlined_call_operand.hbm [shape: f32[2,8,32], index: 0, kind: input, shape index: {}]
  %s1 = inlined_call_operand.hbm [shape: f32[32,96], index: 1, kind: input, shape index: {}]
  %s2 = inlined_call_operand.hbm [shape: f32[1,96], index: 2, kind: input, shape index: {}]
  %s3 = inlined_call_operand.hbm [shape: f32[2,4,8,8], index: 3, kind: output, shape index: {0}]
  %s4 = inlined_call_operand.hbm [shape: f32[2,4,8,8], index: 4, kind: output, shape index: {1}]
  %s5 = inlined_call_operand.hbm [shape: f32[2,4,8,8], index: 5, kind: output, shape index: {2}]
  %6 = xla_tuple %s3, %s4, %s5
  %s7 = sld [smem:[#allocation0]]
  $region73: #{tpu_custom_call.1} parent=0
    _
  %s9 = ssub.s32 1, %s7
  %s10 = scalar_select 0, %s9, %s7
  $region1: #{tpu_custom_call.1} parent=0
    #allocation2 [shape = 'u8[8192]{0}', space=vmem, size = 0x2000, scoped, tag = 'input window, operand 0']
    #allocation3 [shape = 's32[2]{0}', space=sflag, size = 0x8, scoped, tag = 'scoped memory for tpu_custom_call.1']
    #allocation4 [shape = 's32[2]{0}', space=sflag, size = 0x8, scoped, tag = 'scoped memory for tpu_custom_call.1']
    #allocation5 [shape = 'u8[16384]{0}', space=vmem, size = 0x4000, scoped, tag = 'input window, operand 1, single buffered']
    #allocation6 [shape = 's32[1]{0}', space=sflag, size = 0x4, scoped, tag = 'scoped memory for tpu_custom_call.1']
    #allocation7 [shape = 'u8[512]{0}', space=vmem, size = 0x400, scoped, tag = 'input window, operand 2, single buffered']
    #allocation8 [shape = 'u8[32768]{0}', space=vmem, size = 0x8000, scoped, tag = 'output window, operand 0']
    #allocation9 [shape = 'u8[32768]{0}', space=vmem, size = 0x8000, scoped, tag = 'output window, operand 1']
    #allocation10 [shape = 's32[2]{0}', space=sflag, size = 0x8, scoped, tag = 'scoped memory for tpu_custom_call.1']
    #allocation11 [shape = 'u8[32768]{0}', space=vmem, size = 0x8000, scoped, tag = 'output window, operand 2']
    %11 = vsyncpa [#allocation3], 0
    %s12 = scalar_lea.sflag [#allocation3], 1
    %13 = vsyncpa %s12, 0
    %14 = vsyncpa [#allocation6], 0
    %15 = vsyncpa [#allocation4], 0
    %s16 = scalar_lea.sflag [#allocation4], 1
    %17 = vsyncpa %s16, 0
    %18 = vsyncpa [#allocation10], 0
    %s19 = scalar_lea.sflag [#allocation10], 1
    %20 = vsyncpa %s19, 0
    loop: start=0, step=1, limit=4
    $region2: #{tpu_custom_call.1} parent=1 // loop_pre_header
      _
    $region3: #{tpu_custom_call.1} parent=1 // loop_header
      %s22 = sphi 0, %s26
      %p23 = scmp.ge.s32.totalorder %s22, 4
      %s29 = sphi 0, %s41
      %s30 = sphi 0, %s37
      %s31 = sphi 0, %s29
      %s32 = sphi 0, %s30
      %s33 = sphi 0, %s31
      %s34 = sphi 0, %s32
      %s46 = sphi 0, %s48
      %s49 = sphi 0, %s46
      %s50 = sphi 0, %s49
      %s66 = sphi 0, %s50
      %s70 = sphi 0, %s70
      %s72 = sphi 0, %s70
      %s73 = sphi 0, %s72
      %s87 = sphi 0, %s73
      %s91 = sphi 0, %s91
      %s93 = sphi 0, %s91
      %s94 = sphi 0, %s93
      %s108 = sphi 0, %s94
      %s116 = sphi 0, %s118
      %s119 = sphi 0, %s116
      %s120 = sphi 0, %s119
      %s136 = sphi 0, %s120
      %s144 = sphi 0, %s146
      %s147 = sphi 0, %s144
      %s148 = sphi 0, %s147
      %s164 = sphi 0, %s148
      %s172 = sphi 0, %s174
      %s175 = sphi 0, %s172
      %s176 = sphi 0, %s175
      %s192 = sphi 0, %s176
    $region4: #{tpu_custom_call.1} parent=1 // loop_header_branch
      %25 = sbr.rel (%p23) target = $region8
    $region5: #{tpu_custom_call.1} parent=1 // loop_body
      %s27 = ssub.s32 %s22, 1
      %s28 = ssub.s32 %s22, 2
      %s35 = sadd.s32 1, %s30
      %p36 = scmp.ge.s32.totalorder %s35, 1
      %s37 = scalar_select %p36, 0, %s35
      %s38 = sadd.s32 1, %s29
      %s39 = scalar_select %p36, %s38, %s29
      %p40 = scmp.ge.s32.totalorder %s39, 2
      %s41 = scalar_select %p40, 0, %s39
      %s42 = ssub.s32 %s29, %s41
      %s43 = ssub.s32 %s30, %s37
      %s44 = sor.u32 %s42, %s43
      %p45 = scmp.eq.s32.totalorder %s44, 0
      %s47 = sadd.s32 %s46, 1
      %s48 = scalar_select %p45, %s46, %s47
      %p51 = pneg %p45
      %p52 = scmp.eq.s32.totalorder %s22, 1
      %p53 = por %p51, %p52
      %p54 = scmp.ne.s32.totalorder %s46, %s49
      %p55 = scmp.eq.s32.totalorder %s22, 0
      %p56 = por %p54, %p55
      %p57 = scmp.ne.s32.totalorder %s46, %s49
      %p58 = scmp.eq.s32.totalorder %s27, 1
      %p59 = por %p57, %p58
      %p60 = scmp.ne.s32.totalorder %s49, %s50
      %p61 = scmp.eq.s32.totalorder %s27, 0
      %p62 = por %p60, %p61
      %p63 = scmp.ne.s32.totalorder %s49, %s50
      %p64 = scmp.eq.s32.totalorder %s28, 1
      %p65 = por %p63, %p64
      %p67 = scmp.ne.s32.totalorder %s50, %s66
      %p68 = scmp.eq.s32.totalorder %s28, 0
      %p69 = por %p67, %p68
      %s71 = sadd.s32 %s70, 1
      %p74 = scmp.eq.s32.totalorder %s22, 1
      %p75 = scmp.ne.s32.totalorder %s70, %s72
      %p76 = scmp.eq.s32.totalorder %s22, 0
      %p77 = por %p75, %p76
      %p78 = scmp.ne.s32.totalorder %s70, %s72
      %p79 = scmp.eq.s32.totalorder %s27, 1
      %p80 = por %p78, %p79
      %p81 = scmp.ne.s32.totalorder %s72, %s73
      %p82 = scmp.eq.s32.totalorder %s27, 0
      %p83 = por %p81, %p82
      %p84 = scmp.ne.s32.totalorder %s72, %s73
      %p85 = scmp.eq.s32.totalorder %s28, 1
      %p86 = por %p84, %p85
      %p88 = scmp.ne.s32.totalorder %s73, %s87
      %p89 = scmp.eq.s32.totalorder %s28, 0
      %p90 = por %p88, %p89
      %s92 = sadd.s32 %s91, 1
      %p95 = scmp.eq.s32.totalorder %s22, 1
      %p96 = scmp.ne.s32.totalorder %s91, %s93
      %p97 = scmp.eq.s32.totalorder %s22, 0
      %p98 = por %p96, %p97
      %p99 = scmp.ne.s32.totalorder %s91, %s93
      %p100 = scmp.eq.s32.totalorder %s27, 1
      %p101 = por %p99, %p100
      %p102 = scmp.ne.s32.totalorder %s93, %s94
      %p103 = scmp.eq.s32.totalorder %s27, 0
      %p104 = por %p102, %p103
      %p105 = scmp.ne.s32.totalorder %s93, %s94
      %p106 = scmp.eq.s32.totalorder %s28, 1
      %p107 = por %p105, %p106
      %p109 = scmp.ne.s32.totalorder %s94, %s108
      %p110 = scmp.eq.s32.totalorder %s28, 0
      %p111 = por %p109, %p110
      %s112 = ssub.s32 %s29, %s41
      %s113 = ssub.s32 %s30, %s37
      %s114 = sor.u32 %s112, %s113
      %p115 = scmp.eq.s32.totalorder %s114, 0
      %s117 = sadd.s32 %s116, 1
      %s118 = scalar_select %p115, %s116, %s117
      %p121 = pneg %p115
      %p122 = scmp.eq.s32.totalorder %s22, 1
      %p123 = por %p121, %p122
      %p124 = scmp.ne.s32.totalorder %s116, %s119
      %p125 = scmp.eq.s32.totalorder %s22, 0
      %p126 = por %p124, %p125
      %p127 = scmp.ne.s32.totalorder %s116, %s119
      %p128 = scmp.eq.s32.totalorder %s27, 1
      %p129 = por %p127, %p128
      %p130 = scmp.ne.s32.totalorder %s119, %s120
      %p131 = scmp.eq.s32.totalorder %s27, 0
      %p132 = por %p130, %p131
      %p133 = scmp.ne.s32.totalorder %s119, %s120
      %p134 = scmp.eq.s32.totalorder %s28, 1
      %p135 = por %p133, %p134
      %p137 = scmp.ne.s32.totalorder %s120, %s136
      %p138 = scmp.eq.s32.totalorder %s28, 0
      %p139 = por %p137, %p138
      %s140 = ssub.s32 %s29, %s41
      %s141 = ssub.s32 %s30, %s37
      %s142 = sor.u32 %s140, %s141
      %p143 = scmp.eq.s32.totalorder %s142, 0
      %s145 = sadd.s32 %s144, 1
      %s146 = scalar_select %p143, %s144, %s145
      %p149 = pneg %p143
      %p150 = scmp.eq.s32.totalorder %s22, 1
      %p151 = por %p149, %p150
      %p152 = scmp.ne.s32.totalorder %s144, %s147
      %p153 = scmp.eq.s32.totalorder %s22, 0
      %p154 = por %p152, %p153
      %p155 = scmp.ne.s32.totalorder %s144, %s147
      %p156 = scmp.eq.s32.totalorder %s27, 1
      %p157 = por %p155, %p156
      %p158 = scmp.ne.s32.totalorder %s147, %s148
      %p159 = scmp.eq.s32.totalorder %s27, 0
      %p160 = por %p158, %p159
      %p161 = scmp.ne.s32.totalorder %s147, %s148
      %p162 = scmp.eq.s32.totalorder %s28, 1
      %p163 = por %p161, %p162
      %p165 = scmp.ne.s32.totalorder %s148, %s164
      %p166 = scmp.eq.s32.totalorder %s28, 0
      %p167 = por %p165, %p166
      %s168 = ssub.s32 %s29, %s41
      %s169 = ssub.s32 %s30, %s37
      %s170 = sor.u32 %s168, %s169
      %p171 = scmp.eq.s32.totalorder %s170, 0
      %s173 = sadd.s32 %s172, 1
      %s174 = scalar_select %p171, %s172, %s173
      %p177 = pneg %p171
      %p178 = scmp.eq.s32.totalorder %s22, 1
      %p179 = por %p177, %p178
      %p180 = scmp.ne.s32.totalorder %s172, %s175
      %p181 = scmp.eq.s32.totalorder %s22, 0
      %p182 = por %p180, %p181
      %p183 = scmp.ne.s32.totalorder %s172, %s175
      %p184 = scmp.eq.s32.totalorder %s27, 1
      %p185 = por %p183, %p184
      %p186 = scmp.ne.s32.totalorder %s175, %s176
      %p187 = scmp.eq.s32.totalorder %s27, 0
      %p188 = por %p186, %p187
      %p189 = scmp.ne.s32.totalorder %s175, %s176
      %p190 = scmp.eq.s32.totalorder %s28, 1
      %p191 = por %p189, %p190
      %p193 = scmp.ne.s32.totalorder %s176, %s192
      %p194 = scmp.eq.s32.totalorder %s28, 0
      %p195 = por %p193, %p194
      %p196 = scmp.le.s32.totalorder 1, %s22
      %p197 = scmp.lt.s32.totalorder %s22, 3
      %p198 = pnand %p196, %p197
      %p199 = pneg %p198
      // Predicated region
      $region9: #{tpu_custom_call.1} parent=5 // pred_check
        _
      $region10: #{tpu_custom_call.1} parent=5 // pred_check_branch
        %201 = sbr.rel (%p198) target = $region12
      $region11: #{tpu_custom_call.1} parent=5 // pred_region
        %s202 = ssub.s32 %s22, 1
        // Predicated region
        $region13: #{tpu_custom_call.1} parent=11 // pred_check
          %p203 = pneg %p83
        $region14: #{tpu_custom_call.1} parent=11 // pred_check_branch
          %205 = sbr.rel (%p203) target = $region16
        $region15: #{tpu_custom_call.1} parent=11 // pred_region
          %s207 = ssub.s32 512, 512
          %208 = vsyncadd [#allocation6], %s207
          %s209 = sshll.u32 [#allocation5], 4
          %s210 = int_to_ptr.vmem [resolvable:$true] %s209
          %215 = dma.hbm_to_vmem [thread:$0]  %s1, 512, %s210, [#allocation6], 128, 128, 8
        $region16: #{tpu_custom_call.1} parent=11 // pred_fallthru
          _
        // Predicated region
        $region17: #{tpu_custom_call.1} parent=11 // pred_check
          %p216 = pneg %p104
        $region18: #{tpu_custom_call.1} parent=11 // pred_check_branch
          %218 = sbr.rel (%p216) target = $region20
        $region19: #{tpu_custom_call.1} parent=11 // pred_region
          %s220 = ssub.s32 16, 16
          %221 = vsyncadd [#allocation6], %s220
          %s223 = sshll.u32 [#allocation7], 4
          %s224 = int_to_ptr.vmem [resolvable:$true] %s223
          %226 = dma.hbm_to_vmem [thread:$0]  %s2, 16, %s224, [#allocation6]
        $region20: #{tpu_custom_call.1} parent=11 // pred_fallthru
          _
      $region12: #{tpu_custom_call.1} parent=5 // pred_fallthru
        _
      %p227 = scmp.lt.s32.totalorder %s22, 2
      // Predicated region
      $region21: #{tpu_custom_call.1} parent=5 // pred_check
        %p228 = pneg %p227
      $region22: #{tpu_custom_call.1} parent=5 // pred_check_branch
        %230 = sbr.rel (%p228) target = $region24
      $region23: #{tpu_custom_call.1} parent=5 // pred_region
        // Predicated region
        $region25: #{tpu_custom_call.1} parent=23 // pred_check
          %p231 = pneg %p56
        $region26: #{tpu_custom_call.1} parent=23 // pred_check_branch
          %233 = sbr.rel (%p231) target = $region28
        $region27: #{tpu_custom_call.1} parent=23 // pred_region
          %s234 = sand.u32 %s46, 1
          %s235 = scalar_lea.sflag [#allocation3], %s234
          %s236 = sand.u32 %s46, 1
          %s237 = smul.addr %s236, 8
          %s238 = scalar_lea.vmem [#allocation2], %s237
          %s240 = ssub.s32 128, 128
          %241 = vsyncadd %s235, %s240
          %s242 = sadd.s32 %s30, %s29
          %s243 = smul.addr %s242, 128
          %s244 = scalar_lea.hbm %s0, %s243
          %s246 = sshll.u32 %s238, 4
          %s247 = int_to_ptr.vmem [resolvable:$true] %s246
          %249 = dma.hbm_to_vmem [thread:$0]  %s244, 128, %s247, %s235
        $region28: #{tpu_custom_call.1} parent=23 // pred_fallthru
          _
      $region24: #{tpu_custom_call.1} parent=5 // pred_fallthru
        _
      %p250 = scmp.le.s32.totalorder 1, %s22
      %p251 = scmp.lt.s32.totalorder %s22, 3
      %p252 = pnand %p250, %p251
      %p253 = pneg %p252
      // Predicated region
      $region29: #{tpu_custom_call.1} parent=5 // pred_check
        _
      $region30: #{tpu_custom_call.1} parent=5 // pred_check_branch
        %255 = sbr.rel (%p252) target = $region32
      $region31: #{tpu_custom_call.1} parent=5 // pred_region
        %s256 = ssub.s32 %s22, 1
        %s257 = sand.u32 %s49, 1
        %s258 = scalar_lea.sflag [#allocation3], %s257
        %s259 = sand.u32 %s49, 1
        %s260 = smul.addr %s259, 8
        %s261 = scalar_lea.vmem [#allocation2], %s260
        // Predicated region
        $region33: #{tpu_custom_call.1} parent=31 // pred_check
          %p262 = pneg %p62
        $region34: #{tpu_custom_call.1} parent=31 // pred_check_branch
          %264 = sbr.rel (%p262) target = $region36
        $region35: #{tpu_custom_call.1} parent=31 // pred_region
          %265 = dma.done %s258, 128
        $region36: #{tpu_custom_call.1} parent=31 // pred_fallthru
          _
        // Predicated region
        $region37: #{tpu_custom_call.1} parent=31 // pred_check
          %p266 = pneg %p83
        $region38: #{tpu_custom_call.1} parent=31 // pred_check_branch
          %268 = sbr.rel (%p266) target = $region40
        $region39: #{tpu_custom_call.1} parent=31 // pred_region
          %269 = dma.done [#allocation6], 512
        $region40: #{tpu_custom_call.1} parent=31 // pred_fallthru
          _
        // Predicated region
        $region41: #{tpu_custom_call.1} parent=31 // pred_check
          %p270 = pneg %p104
        $region42: #{tpu_custom_call.1} parent=31 // pred_check_branch
          %272 = sbr.rel (%p270) target = $region44
        $region43: #{tpu_custom_call.1} parent=31 // pred_region
          %273 = dma.done [#allocation6], 16
        $region44: #{tpu_custom_call.1} parent=31 // pred_fallthru
          _
        %s274 = sand.u32 %s49, 1
        %s275 = scalar_lea.sflag [#allocation3], %s274
        %s276 = sand.u32 %s49, 1
        %s277 = smul.addr %s276, 8
        %s278 = scalar_lea.vmem [#allocation2], %s277
        %p279 = pneg %p62
        %p280 = pneg %p59
        %p281 = pneg %p83
        %p282 = pneg %p80
        %p283 = pneg %p104
        %p284 = pneg %p101
        %p285 = pneg %p132
        %p286 = pneg %p129
        %s287 = sand.u32 %s119, 1
        %s288 = scalar_lea.sflag [#allocation4], %s287
        %s289 = sand.u32 %s119, 1
        %s290 = smul.addr %s289, 32
        %s291 = scalar_lea.vmem [#allocation8], %s290
        %p292 = pneg %p160
        %p293 = pneg %p157
        %s294 = sand.u32 %s27, 1
        %s295 = scalar_lea.sflag [#allocation10], %s294
        %s296 = sand.u32 %s147, 1
        %s297 = smul.addr %s296, 32
        %s298 = scalar_lea.vmem [#allocation9], %s297
        %p299 = pneg %p188
        %p300 = pneg %p185
        %s301 = sand.u32 %s27, 1
        %s302 = scalar_lea.sflag [#allocation10], %s301
        %s303 = sand.u32 %s175, 1
        %s304 = smul.addr %s303, 32
        %s305 = scalar_lea.vmem [#allocation11], %s304
        %v306 = vld [vmem:[%s261] sm:$0xff]
        %v307 = vld [vmem:[#allocation5] sm:$0xff]
        %v308 = vld [vmem:[#allocation5 + $0x8] sm:$0xff]
        %v309 = vld [vmem:[#allocation5 + $0x10] sm:$0xff]
        %v310 = vld [vmem:[#allocation5 + $0x18] sm:$0xff]
        %v311 = vld [vmem:[#allocation7] sm:$0x1]
        %v313 = vlaneseq
        %v314 = vshrl.u32 %v313, 7
        %v315 = vsub.s32 0, %v314
        %v316 = vrot.slane %v311, %v315
        %vm318 = vcmask 261120
        %v320 = vsel %vm318, %v306, 0
        %322 = vmatprep.subr.mxu0 0.0
        %323 = vmatpush1.msra.mxu0 %v307
        %324 = vmatprep.subr.mxu0 0.0
        %325 = vmatpush1.msra.mxu0 %v308
        %326 = vmatprep.subr.mxu0 0.0
        %327 = vmatpush1.msra.mxu0 %v309
        %328 = vmatprep.subr.mxu0 0.0
        %329 = vmatpush1.msra.mxu0 %v310
        %330 = vmatprep.subr.mxu0 0.0
        %331 = vmatpush1.msra.mxu0 0.0
        %332 = vmatprep.subr.mxu0 0.0
        %333 = vmatpush1.msra.mxu0 0.0
        %334 = vmatprep.subr.mxu0 0.0
        %335 = vmatpush1.msra.mxu0 0.0
        %336 = vmatprep.subr.mxu0 0.0
        %337 = vmatpush1.msra.mxu0 0.0
        %338 = vmatprep.subr.mxu0 0.0
        %339 = vmatpush1.msra.mxu0 0.0
        %340 = vmatprep.subr.mxu0 0.0
        %341 = vmatpush1.msra.mxu0 0.0
        %342 = vmatprep.subr.mxu0 0.0
        %343 = vmatpush1.msra.mxu0 0.0
        %344 = vmatprep.subr.mxu0 0.0
        %345 = vmatpush1.msra.mxu0 0.0
        %346 = vmatprep.subr.mxu0 0.0
        %347 = vmatpush1.msra.mxu0 0.0
        %348 = vmatprep.subr.mxu0 0.0
        %349 = vmatpush1.msra.mxu0 0.0
        %350 = vmatprep.subr.mxu0 0.0
        %351 = vmatpush1.msra.mxu0 0.0
        %352 = vmatprep.subr.mxu0 0.0
        %353 = vmatpush1.msra.mxu0 0.0
        %354 = vmatprep.subr.mxu0 0.0
        %355 = vmatpush1.msra.mxu0 0.0
        %356 = vmatprep.subr.mxu0 0.0
        %357 = vmatpush1.msra.mxu0 0.0
        %358 = vmatprep.subr.mxu0 0.0
        %359 = vmatpush1.msra.mxu0 0.0
        %360 = vmatprep.subr.mxu0 0.0
        %361 = vmatpush1.msra.mxu0 0.0
        %362 = vmatprep.subr.mxu0 0.0
        %363 = vmatpush1.msra.mxu0 0.0
        %364 = vmatprep.subr.mxu0 0.0
        %365 = vmatpush1.msra.mxu0 0.0
        %366 = vmatprep.subr.mxu0 0.0
        %367 = vmatpush1.msra.mxu0 0.0
        %368 = vmatprep.subr.mxu0 0.0
        %369 = vmatpush1.msra.mxu0 0.0
        %370 = vmatprep.subr.mxu0 0.0
        %371 = vmatpush1.msra.mxu0 0.0
        %372 = vmatprep.subr.mxu0 0.0
        %373 = vmatpush1.msra.mxu0 0.0
        %374 = vmatprep.subr.mxu0 0.0
        %375 = vmatpush1.msra.mxu0 0.0
        %376 = vmatprep.subr.mxu0 0.0
        %377 = vmatpush1.msra.mxu0 0.0
        %378 = vmatprep.subr.mxu0 0.0
        %379 = vmatpush1.msra.mxu0 0.0
        %380 = vmatprep.subr.mxu0 0.0
        %381 = vmatpush1.msra.mxu0 0.0
        %382 = vmatprep.subr.mxu0 0.0
        %383 = vmatpush1.msra.mxu0 0.0
        %384 = vmatprep.subr.mxu0 0.0
        %385 = vmatpush1.msra.mxu0 0.0
        %386 = vmatprep.mubr.f32.mxu0 0.0
        %387 = vmatmul.mubr.f32.gmra.mrb[0].mxu0 %v320
        %v388 = vpop.f32.mrb[0].mxu0
        %v389 = vadd.f32 %v316, %v388
        %v390 = vpop.f32.mrb[0].mxu0
        %391 = vdwg.mxu0
        %393 = vrot.lane.b32.xlu0 %v389, 120
        %v394 = vpop.permute.xlu0 %393
        %396 = vrot.lane.b32.xlu0 %v389, 112
        %v397 = vpop.permute.xlu0 %396
        %399 = vrot.lane.b32.xlu0 %v389, 104
        %v400 = vpop.permute.xlu0 %399
        %v402 = vcombine.low %v389, %v397
        %v403 = vcombine.high %v389, %v397
        %v405 = vunpack.c.l.s4 1983009808
        %v406 = vunpack.c.0.s8 %v405
        %v407 = vlaneseq
        %v408 = vshrl.u32 %v407, 7
        %v409 = vsub.s32 %v406, %v408
        %v410 = vrot.slane %v402, %v409
        %v412 = vunpack.c.l.s4 1983009808
        %v413 = vunpack.c.0.s8 %v412
        %v414 = vlaneseq
        %v415 = vshrl.u32 %v414, 7
        %v416 = vsub.s32 %v413, %v415
        %v417 = vrot.slane %v403, %v416
        %v418 = vcombine.low %v394, %v400
        %v419 = vcombine.high %v394, %v400
        %v421 = vunpack.c.l.s4 1983009808
        %v422 = vunpack.c.0.s8 %v421
        %v423 = vlaneseq
        %v424 = vshrl.u32 %v423, 7
        %v425 = vsub.s32 %v422, %v424
        %v426 = vrot.slane %v418, %v425
        %v428 = vunpack.c.l.s4 1983009808
        %v429 = vunpack.c.0.s8 %v428
        %v430 = vlaneseq
        %v431 = vshrl.u32 %v430, 7
        %v432 = vsub.s32 %v429, %v431
        %v433 = vrot.slane %v419, %v432
        %v434 = vcombine.low %v410, %v426
        %v435 = vcombine.high %v410, %v426
        %v437 = vunpack.c.l.s4 1934713408
        %v438 = vunpack.c.0.s8 %v437
        %v439 = vlaneseq
        %v440 = vshrl.u32 %v439, 7
        %v441 = vsub.s32 %v438, %v440
        %v442 = vrot.slane %v434, %v441
        %v444 = vunpack.c.l.s4 1934713408
        %v445 = vunpack.c.0.s8 %v444
        %v446 = vlaneseq
        %v447 = vshrl.u32 %v446, 7
        %v448 = vsub.s32 %v445, %v447
        %v449 = vrot.slane %v435, %v448
        %v450 = vcombine.low %v417, %v433
        %v451 = vcombine.high %v417, %v433
        %v453 = vunpack.c.l.s4 1934713408
        %v454 = vunpack.c.0.s8 %v453
        %v455 = vlaneseq
        %v456 = vshrl.u32 %v455, 7
        %v457 = vsub.s32 %v454, %v456
        %v458 = vrot.slane %v450, %v457
        %v460 = vunpack.c.l.s4 1934713408
        %v461 = vunpack.c.0.s8 %v460
        %v462 = vlaneseq
        %v463 = vshrl.u32 %v462, 7
        %v464 = vsub.s32 %v461, %v463
        %v465 = vrot.slane %v451, %v464
        %v466 = vcombine.high %v442, 0.0
        %v467 = vcombine.high %v449, 0.0
        %v468 = vcombine.high %v458, 0.0
        %v469 = vcombine.high %v465, 0.0
        %v470 = vcombine.low %v442, %v449
        %v472 = vunpack.c.l.s4 1983009808
        %v473 = vunpack.c.0.s8 %v472
        %v474 = vlaneseq
        %v475 = vshrl.u32 %v474, 7
        %v476 = vsub.s32 %v473, %v475
        %v477 = vrot.slane %v470, %v476
        %v478 = vcombine.low %v466, %v467
        %v480 = vunpack.c.l.s4 1983009808
        %v481 = vunpack.c.0.s8 %v480
        %v482 = vlaneseq
        %v483 = vshrl.u32 %v482, 7
        %v484 = vsub.s32 %v481, %v483
        %v485 = vrot.slane %v478, %v484
        %v486 = vcombine.low %v458, %v465
        %v488 = vunpack.c.l.s4 1983009808
        %v489 = vunpack.c.0.s8 %v488
        %v490 = vlaneseq
        %v491 = vshrl.u32 %v490, 7
        %v492 = vsub.s32 %v489, %v491
        %v493 = vrot.slane %v486, %v492
        %v494 = vcombine.low %v468, %v469
        %v496 = vunpack.c.l.s4 1983009808
        %v497 = vunpack.c.0.s8 %v496
        %v498 = vlaneseq
        %v499 = vshrl.u32 %v498, 7
        %v500 = vsub.s32 %v497, %v499
        %v501 = vrot.slane %v494, %v500
        %v502 = vcombine.low %v477, %v485
        %v503 = vcombine.high %v477, %v485
        %v505 = vunpack.c.l.s4 1934713408
        %v506 = vunpack.c.0.s8 %v505
        %v507 = vlaneseq
        %v508 = vshrl.u32 %v507, 7
        %v509 = vsub.s32 %v506, %v508
        %v510 = vrot.slane %v502, %v509
        %v512 = vunpack.c.l.s4 1934713408
        %v513 = vunpack.c.0.s8 %v512
        %v514 = vlaneseq
        %v515 = vshrl.u32 %v514, 7
        %v516 = vsub.s32 %v513, %v515
        %v517 = vrot.slane %v503, %v516
        %v518 = vcombine.low %v493, %v501
        %v519 = vcombine.high %v493, %v501
        %v521 = vunpack.c.l.s4 1934713408
        %v522 = vunpack.c.0.s8 %v521
        %v523 = vlaneseq
        %v524 = vshrl.u32 %v523, 7
        %v525 = vsub.s32 %v522, %v524
        %v526 = vrot.slane %v518, %v525
        %v528 = vunpack.c.l.s4 1934713408
        %v529 = vunpack.c.0.s8 %v528
        %v530 = vlaneseq
        %v531 = vshrl.u32 %v530, 7
        %v532 = vsub.s32 %v529, %v531
        %v533 = vrot.slane %v519, %v532
        %v534 = vcombine.low %v510, %v526
        %v535 = vcombine.high %v510, %v526
        %v536 = vcombine.low %v517, %v533
        %v537 = vcombine.high %v517, %v533
        %vm538 = vcmask 64512
        %539 = vst.msk [vmem:[%s291] sm:$0xff] %vm538, %v534
        %540 = vst.msk [vmem:[%s291 + $0x8] sm:$0xff] %vm538, %v535
        %541 = vst.msk [vmem:[%s291 + $0x10] sm:$0xff] %vm538, %v536
        %542 = vst.msk [vmem:[%s291 + $0x18] sm:$0xff] %vm538, %v537
        %543 = vrot.lane.b32.xlu0 %v389, 96
        %v544 = vpop.permute.xlu0 %543
        %545 = vrot.lane.b32.xlu0 %v394, 96
        %v546 = vpop.permute.xlu0 %545
        %547 = vrot.lane.b32.xlu0 %v397, 96
        %v548 = vpop.permute.xlu0 %547
        %549 = vrot.lane.b32.xlu0 %v400, 96
        %v550 = vpop.permute.xlu0 %549
        %v555 = vcombine.low %v544, %v548
        %v556 = vcombine.high %v544, %v548
        %v558 = vunpack.c.l.s4 1983009808
        %v559 = vunpack.c.0.s8 %v558
        %v560 = vlaneseq
        %v561 = vshrl.u32 %v560, 7
        %v562 = vsub.s32 %v559, %v561
        %v563 = vrot.slane %v555, %v562
        %v565 = vunpack.c.l.s4 1983009808
        %v566 = vunpack.c.0.s8 %v565
        %v567 = vlaneseq
        %v568 = vshrl.u32 %v567, 7
        %v569 = vsub.s32 %v566, %v568
        %v570 = vrot.slane %v556, %v569
        %v571 = vcombine.low %v546, %v550
        %v572 = vcombine.high %v546, %v550
        %v574 = vunpack.c.l.s4 1983009808
        %v575 = vunpack.c.0.s8 %v574
        %v576 = vlaneseq
        %v577 = vshrl.u32 %v576, 7
        %v578 = vsub.s32 %v575, %v577
        %v579 = vrot.slane %v571, %v578
        %v581 = vunpack.c.l.s4 1983009808
        %v582 = vunpack.c.0.s8 %v581
        %v583 = vlaneseq
        %v584 = vshrl.u32 %v583, 7
        %v585 = vsub.s32 %v582, %v584
        %v586 = vrot.slane %v572, %v585
        %v587 = vcombine.low %v563, %v579
        %v588 = vcombine.high %v563, %v579
        %v590 = vunpack.c.l.s4 1934713408
        %v591 = vunpack.c.0.s8 %v590
        %v592 = vlaneseq
        %v593 = vshrl.u32 %v592, 7
        %v594 = vsub.s32 %v591, %v593
        %v595 = vrot.slane %v587, %v594
        %v597 = vunpack.c.l.s4 1934713408
        %v598 = vunpack.c.0.s8 %v597
        %v599 = vlaneseq
        %v600 = vshrl.u32 %v599, 7
        %v601 = vsub.s32 %v598, %v600
        %v602 = vrot.slane %v588, %v601
        %v603 = vcombine.low %v570, %v586
        %v604 = vcombine.high %v570, %v586
        %v606 = vunpack.c.l.s4 1934713408
        %v607 = vunpack.c.0.s8 %v606
        %v608 = vlaneseq
        %v609 = vshrl.u32 %v608, 7
        %v610 = vsub.s32 %v607, %v609
        %v611 = vrot.slane %v603, %v610
        %v613 = vunpack.c.l.s4 1934713408
        %v614 = vunpack.c.0.s8 %v613
        %v615 = vlaneseq
        %v616 = vshrl.u32 %v615, 7
        %v617 = vsub.s32 %v614, %v616
        %v618 = vrot.slane %v604, %v617
        %v619 = vcombine.high %v595, 0.0
        %v620 = vcombine.high %v602, 0.0
        %v621 = vcombine.high %v611, 0.0
        %v622 = vcombine.high %v618, 0.0
        %v623 = vcombine.low %v595, %v602
        %v625 = vunpack.c.l.s4 1983009808
        %v626 = vunpack.c.0.s8 %v625
        %v627 = vlaneseq
        %v628 = vshrl.u32 %v627, 7
        %v629 = vsub.s32 %v626, %v628
        %v630 = vrot.slane %v623, %v629
        %v631 = vcombine.low %v619, %v620
        %v633 = vunpack.c.l.s4 1983009808
        %v634 = vunpack.c.0.s8 %v633
        %v635 = vlaneseq
        %v636 = vshrl.u32 %v635, 7
        %v637 = vsub.s32 %v634, %v636
        %v638 = vrot.slane %v631, %v637
        %v639 = vcombine.low %v611, %v618
        %v641 = vunpack.c.l.s4 1983009808
        %v642 = vunpack.c.0.s8 %v641
        %v643 = vlaneseq
        %v644 = vshrl.u32 %v643, 7
        %v645 = vsub.s32 %v642, %v644
        %v646 = vrot.slane %v639, %v645
        %v647 = vcombine.low %v621, %v622
        %v649 = vunpack.c.l.s4 1983009808
        %v650 = vunpack.c.0.s8 %v649
        %v651 = vlaneseq
        %v652 = vshrl.u32 %v651, 7
        %v653 = vsub.s32 %v650, %v652
        %v654 = vrot.slane %v647, %v653
        %v655 = vcombine.low %v630, %v638
        %v656 = vcombine.high %v630, %v638
        %v658 = vunpack.c.l.s4 1934713408
        %v659 = vunpack.c.0.s8 %v658
        %v660 = vlaneseq
        %v661 = vshrl.u32 %v660, 7
        %v662 = vsub.s32 %v659, %v661
        %v663 = vrot.slane %v655, %v662
        %v665 = vunpack.c.l.s4 1934713408
        %v666 = vunpack.c.0.s8 %v665
        %v667 = vlaneseq
        %v668 = vshrl.u32 %v667, 7
        %v669 = vsub.s32 %v666, %v668
        %v670 = vrot.slane %v656, %v669
        %v671 = vcombine.low %v646, %v654
        %v672 = vcombine.high %v646, %v654
        %v674 = vunpack.c.l.s4 1934713408
        %v675 = vunpack.c.0.s8 %v674
        %v676 = vlaneseq
        %v677 = vshrl.u32 %v676, 7
        %v678 = vsub.s32 %v675, %v677
        %v679 = vrot.slane %v671, %v678
        %v681 = vunpack.c.l.s4 1934713408
        %v682 = vunpack.c.0.s8 %v681
        %v683 = vlaneseq
        %v684 = vshrl.u32 %v683, 7
        %v685 = vsub.s32 %v682, %v684
        %v686 = vrot.slane %v672, %v685
        %v687 = vcombine.low %v663, %v679
        %v688 = vcombine.high %v663, %v679
        %v689 = vcombine.low %v670, %v686
        %v690 = vcombine.high %v670, %v686
        %691 = vst.msk [vmem:[%s298] sm:$0xff] %vm538, %v687
        %692 = vst.msk [vmem:[%s298 + $0x8] sm:$0xff] %vm538, %v688
        %693 = vst.msk [vmem:[%s298 + $0x10] sm:$0xff] %vm538, %v689
        %694 = vst.msk [vmem:[%s298 + $0x18] sm:$0xff] %vm538, %v690
        %695 = vrot.lane.b32.xlu0 %v389, 64
        %v696 = vpop.permute.xlu0 %695
        %697 = vrot.lane.b32.xlu0 %v394, 64
        %v698 = vpop.permute.xlu0 %697
        %699 = vrot.lane.b32.xlu0 %v397, 64
        %v700 = vpop.permute.xlu0 %699
        %701 = vrot.lane.b32.xlu0 %v400, 64
        %v702 = vpop.permute.xlu0 %701
        %v707 = vcombine.low %v696, %v700
        %v708 = vcombine.high %v696, %v700
        %v710 = vunpack.c.l.s4 1983009808
        %v711 = vunpack.c.0.s8 %v710
        %v712 = vlaneseq
        %v713 = vshrl.u32 %v712, 7
        %v714 = vsub.s32 %v711, %v713
        %v715 = vrot.slane %v707, %v714
        %v717 = vunpack.c.l.s4 1983009808
        %v718 = vunpack.c.0.s8 %v717
        %v719 = vlaneseq
        %v720 = vshrl.u32 %v719, 7
        %v721 = vsub.s32 %v718, %v720
        %v722 = vrot.slane %v708, %v721
        %v723 = vcombine.low %v698, %v702
        %v724 = vcombine.high %v698, %v702
        %v726 = vunpack.c.l.s4 1983009808
        %v727 = vunpack.c.0.s8 %v726
        %v728 = vlaneseq
        %v729 = vshrl.u32 %v728, 7
        %v730 = vsub.s32 %v727, %v729
        %v731 = vrot.slane %v723, %v730
        %v733 = vunpack.c.l.s4 1983009808
        %v734 = vunpack.c.0.s8 %v733
        %v735 = vlaneseq
        %v736 = vshrl.u32 %v735, 7
        %v737 = vsub.s32 %v734, %v736
        %v738 = vrot.slane %v724, %v737
        %v739 = vcombine.low %v715, %v731
        %v740 = vcombine.high %v715, %v731
        %v742 = vunpack.c.l.s4 1934713408
        %v743 = vunpack.c.0.s8 %v742
        %v744 = vlaneseq
        %v745 = vshrl.u32 %v744, 7
        %v746 = vsub.s32 %v743, %v745
        %v747 = vrot.slane %v739, %v746
        %v749 = vunpack.c.l.s4 1934713408
        %v750 = vunpack.c.0.s8 %v749
        %v751 = vlaneseq
        %v752 = vshrl.u32 %v751, 7
        %v753 = vsub.s32 %v750, %v752
        %v754 = vrot.slane %v740, %v753
        %v755 = vcombine.low %v722, %v738
        %v756 = vcombine.high %v722, %v738
        %v758 = vunpack.c.l.s4 1934713408
        %v759 = vunpack.c.0.s8 %v758
        %v760 = vlaneseq
        %v761 = vshrl.u32 %v760, 7
        %v762 = vsub.s32 %v759, %v761
        %v763 = vrot.slane %v755, %v762
        %v765 = vunpack.c.l.s4 1934713408
        %v766 = vunpack.c.0.s8 %v765
        %v767 = vlaneseq
        %v768 = vshrl.u32 %v767, 7
        %v769 = vsub.s32 %v766, %v768
        %v770 = vrot.slane %v756, %v769
        %v771 = vcombine.high %v747, 0.0
        %v772 = vcombine.high %v754, 0.0
        %v773 = vcombine.high %v763, 0.0
        %v774 = vcombine.high %v770, 0.0
        %v775 = vcombine.low %v747, %v754
        %v777 = vunpack.c.l.s4 1983009808
        %v778 = vunpack.c.0.s8 %v777
        %v779 = vlaneseq
        %v780 = vshrl.u32 %v779, 7
        %v781 = vsub.s32 %v778, %v780
        %v782 = vrot.slane %v775, %v781
        %v783 = vcombine.low %v771, %v772
        %v785 = vunpack.c.l.s4 1983009808
        %v786 = vunpack.c.0.s8 %v785
        %v787 = vlaneseq
        %v788 = vshrl.u32 %v787, 7
        %v789 = vsub.s32 %v786, %v788
        %v790 = vrot.slane %v783, %v789
        %v791 = vcombine.low %v763, %v770
        %v793 = vunpack.c.l.s4 1983009808
        %v794 = vunpack.c.0.s8 %v793
        %v795 = vlaneseq
        %v796 = vshrl.u32 %v795, 7
        %v797 = vsub.s32 %v794, %v796
        %v798 = vrot.slane %v791, %v797
        %v799 = vcombine.low %v773, %v774
        %v801 = vunpack.c.l.s4 1983009808
        %v802 = vunpack.c.0.s8 %v801
        %v803 = vlaneseq
        %v804 = vshrl.u32 %v803, 7
        %v805 = vsub.s32 %v802, %v804
        %v806 = vrot.slane %v799, %v805
        %v807 = vcombine.low %v782, %v790
        %v808 = vcombine.high %v782, %v790
        %v810 = vunpack.c.l.s4 1934713408
        %v811 = vunpack.c.0.s8 %v810
        %v812 = vlaneseq
        %v813 = vshrl.u32 %v812, 7
        %v814 = vsub.s32 %v811, %v813
        %v815 = vrot.slane %v807, %v814
        %v817 = vunpack.c.l.s4 1934713408
        %v818 = vunpack.c.0.s8 %v817
        %v819 = vlaneseq
        %v820 = vshrl.u32 %v819, 7
        %v821 = vsub.s32 %v818, %v820
        %v822 = vrot.slane %v808, %v821
        %v823 = vcombine.low %v798, %v806
        %v824 = vcombine.high %v798, %v806
        %v826 = vunpack.c.l.s4 1934713408
        %v827 = vunpack.c.0.s8 %v826
        %v828 = vlaneseq
        %v829 = vshrl.u32 %v828, 7
        %v830 = vsub.s32 %v827, %v829
        %v831 = vrot.slane %v823, %v830
        %v833 = vunpack.c.l.s4 1934713408
        %v834 = vunpack.c.0.s8 %v833
        %v835 = vlaneseq
        %v836 = vshrl.u32 %v835, 7
        %v837 = vsub.s32 %v834, %v836
        %v838 = vrot.slane %v824, %v837
        %v839 = vcombine.low %v815, %v831
        %v840 = vcombine.high %v815, %v831
        %v841 = vcombine.low %v822, %v838
        %v842 = vcombine.high %v822, %v838
        %843 = vst.msk [vmem:[%s305] sm:$0xff] %vm538, %v839
        %844 = vst.msk [vmem:[%s305 + $0x8] sm:$0xff] %vm538, %v840
        %845 = vst.msk [vmem:[%s305 + $0x10] sm:$0xff] %vm538, %v841
        %846 = vst.msk [vmem:[%s305 + $0x18] sm:$0xff] %vm538, %v842
        %s847 = sand.u32 %s119, 1
        %s848 = scalar_lea.sflag [#allocation4], %s847
        %s849 = sand.u32 %s119, 1
        %s850 = smul.addr %s849, 32
        %s851 = scalar_lea.vmem [#allocation8], %s850
        %s852 = sand.u32 %s27, 1
        %s853 = scalar_lea.sflag [#allocation10], %s852
        %s854 = sand.u32 %s147, 1
        %s855 = smul.addr %s854, 32
        %s856 = scalar_lea.vmem [#allocation9], %s855
        %s857 = sand.u32 %s27, 1
        %s858 = scalar_lea.sflag [#allocation10], %s857
        %s859 = sand.u32 %s175, 1
        %s860 = smul.addr %s859, 32
        %s861 = scalar_lea.vmem [#allocation11], %s860
        // Predicated region
        $region45: #{tpu_custom_call.1} parent=31 // pred_check
          %p862 = pneg %p129
        $region46: #{tpu_custom_call.1} parent=31 // pred_check_branch
          %864 = sbr.rel (%p862) target = $region48
        $region47: #{tpu_custom_call.1} parent=31 // pred_region
          %s866 = ssub.s32 512, 512
          %867 = vsyncadd %s848, %s866
          %s868 = smul.addr %s31, 4
          %s869 = sadd.s32 %s32, %s868
          %s870 = smul.addr %s869, 128
          %s871 = scalar_lea.hbm %s3, %s870
          %s872 = sshll.u32 %s851, 4
          %s873 = int_to_ptr.vmem [resolvable:$true] %s872
          %878 = dma.vmem_to_hbm [thread:$0]  %s873, 512, %s871, %s848, 128, 128, 8
        $region48: #{tpu_custom_call.1} parent=31 // pred_fallthru
          _
        // Predicated region
        $region49: #{tpu_custom_call.1} parent=31 // pred_check
          %p879 = pneg %p157
        $region50: #{tpu_custom_call.1} parent=31 // pred_check_branch
          %881 = sbr.rel (%p879) target = $region52
        $region51: #{tpu_custom_call.1} parent=31 // pred_region
          %s883 = ssub.s32 512, 512
          %884 = vsyncadd %s853, %s883
          %s885 = smul.addr %s31, 4
          %s886 = sadd.s32 %s32, %s885
          %s887 = smul.addr %s886, 128
          %s888 = scalar_lea.hbm %s4, %s887
          %s889 = sshll.u32 %s856, 4
          %s890 = int_to_ptr.vmem [resolvable:$true] %s889
          %895 = dma.vmem_to_hbm [thread:$0]  %s890, 512, %s888, %s853, 128, 128, 8
        $region52: #{tpu_custom_call.1} parent=31 // pred_fallthru
          _
        // Predicated region
        $region53: #{tpu_custom_call.1} parent=31 // pred_check
          %p896 = pneg %p185
        $region54: #{tpu_custom_call.1} parent=31 // pred_check_branch
          %898 = sbr.rel (%p896) target = $region56
        $region55: #{tpu_custom_call.1} parent=31 // pred_region
          %s900 = ssub.s32 512, 512
          %901 = vsyncadd %s858, %s900
          %s902 = smul.addr %s31, 4
          %s903 = sadd.s32 %s32, %s902
          %s904 = smul.addr %s903, 128
          %s905 = scalar_lea.hbm %s5, %s904
          %s906 = sshll.u32 %s861, 4
          %s907 = int_to_ptr.vmem [resolvable:$true] %s906
          %912 = dma.vmem_to_hbm [thread:$0]  %s907, 512, %s905, %s858, 128, 128, 8
        $region56: #{tpu_custom_call.1} parent=31 // pred_fallthru
          _
      $region32: #{tpu_custom_call.1} parent=5 // pred_fallthru
        _
      %p913 = scmp.le.s32.totalorder 2, %s22
      // Predicated region
      $region57: #{tpu_custom_call.1} parent=5 // pred_check
        %p914 = pneg %p913
      $region58: #{tpu_custom_call.1} parent=5 // pred_check_branch
        %916 = sbr.rel (%p914) target = $region60
      $region59: #{tpu_custom_call.1} parent=5 // pred_region
        %s917 = ssub.s32 %s22, 2
        // Predicated region
        $region61: #{tpu_custom_call.1} parent=59 // pred_check
          %p918 = pneg %p135
        $region62: #{tpu_custom_call.1} parent=59 // pred_check_branch
          %920 = sbr.rel (%p918) target = $region64
        $region63: #{tpu_custom_call.1} parent=59 // pred_region
          %s921 = sand.u32 %s120, 1
          %s922 = scalar_lea.sflag [#allocation4], %s921
          %s923 = sand.u32 %s120, 1
          %s924 = smul.addr %s923, 32
          %s925 = scalar_lea.vmem [#allocation8], %s924
          %926 = dma.done %s922, 512
        $region64: #{tpu_custom_call.1} parent=59 // pred_fallthru
          _
        // Predicated region
        $region65: #{tpu_custom_call.1} parent=59 // pred_check
          %p927 = pneg %p163
        $region66: #{tpu_custom_call.1} parent=59 // pred_check_branch
          %929 = sbr.rel (%p927) target = $region68
        $region67: #{tpu_custom_call.1} parent=59 // pred_region
          %s930 = sand.u32 %s28, 1
          %s931 = scalar_lea.sflag [#allocation10], %s930
          %s932 = sand.u32 %s148, 1
          %s933 = smul.addr %s932, 32
          %s934 = scalar_lea.vmem [#allocation9], %s933
          %935 = dma.done %s931, 512
        $region68: #{tpu_custom_call.1} parent=59 // pred_fallthru
          _
        // Predicated region
        $region69: #{tpu_custom_call.1} parent=59 // pred_check
          %p936 = pneg %p191
        $region70: #{tpu_custom_call.1} parent=59 // pred_check_branch
          %938 = sbr.rel (%p936) target = $region72
        $region71: #{tpu_custom_call.1} parent=59 // pred_region
          %s939 = sand.u32 %s28, 1
          %s940 = scalar_lea.sflag [#allocation10], %s939
          %s941 = sand.u32 %s176, 1
          %s942 = smul.addr %s941, 32
          %s943 = scalar_lea.vmem [#allocation11], %s942
          %944 = dma.done %s940, 512
        $region72: #{tpu_custom_call.1} parent=59 // pred_fallthru
          _
      $region60: #{tpu_custom_call.1} parent=5 // pred_fallthru
        _
    $region6: #{tpu_custom_call.1} parent=1 // loop_footer
      %s26 = sadd.s32 1, %s22
    $region7: #{tpu_custom_call.1} parent=1 // loop_footer_branch
      %21 = sbr.rel target = $region3
    $region8: #{tpu_custom_call.1} parent=1 // loop_exit
      _
    %945 = vsyncpa [#allocation3], 1
    %s946 = scalar_lea.sflag [#allocation3], 1
    %947 = vsyncpa %s946, 1
    %948 = vsyncpa [#allocation6], 1
    %949 = vsyncpa [#allocation4], 1
    %s950 = scalar_lea.sflag [#allocation4], 1
    %951 = vsyncpa %s950, 1
    %952 = vsyncpa [#allocation10], 1
    %s953 = scalar_lea.sflag [#allocation10], 1
    %954 = vsyncpa %s953, 1

</llo_original>
